<compile_context>
chip_gen: v7x
topology: tpu7x:2x2x1
jax: 0.10.0
libtpu: 0.0.40
codegen_flags: <defaults>
</compile_context>

<pallas_src>
import functools

import jax
import jax.numpy as jnp
import numpy as np
from jax.experimental import pallas as pl
from jax.experimental.pallas import tpu as pltpu

LANES = 128
MAX_TILE_ROWS = 512   # 512x128 f32 tile = 256 KiB; double-buffered it is well
                      # under the default scoped-VMEM limit on every generation.
NCORES = 2            # leading parallel grid axis (both v7x TensorCores).
ROW_ALIGN = 32        # keeps the sublane dim packed for dtypes down to int8.


def _round_up(x, m):
    return ((x + m - 1) // m) * m


def _stats_kernel(x_ref, acc_ref, *, bits):
    """Accumulate, per candidate step s in [0, bits):
         acc[2s]   += sum over tile of x * q_s(x)
         acc[2s+1] += sum over tile of q_s(x)**2
         acc[2b]   += sum over tile of x**2
       where q_s(x) = clamp(round(x * 2**(bits-1-s)), qmin, qmax) is the
       *integer* quantized value.  The exact power-of-two scale factors are
       re-applied in the JAX glue, which is bit-identical to dequantizing per
       element.  Accumulation is pure elementwise VPU adds into (8, 128)
       slots; sublane/lane reductions are done once in the glue."""
    @pl.when(pl.program_id(1) == 0)
    def _():
        acc_ref[...] = jnp.zeros_like(acc_ref)

    tile_rows = x_ref.shape[0]
    x = x_ref[...].astype(jnp.float32).reshape(tile_rows // 8, 8, LANES)

    qmin = float(-(1 << (bits - 1)))
    qmax = float((1 << (bits - 1)) - 1)
    qrange = float(1 << (bits - 1))

    acc_ref[2 * bits] += jnp.sum(x * x, axis=0)
    for s in range(bits):  # static unroll, bits is small
        inv_scale = qrange / (2.0 ** s)  # exact power of two: x*inv == x/scale
        # quantize -> round (half-to-even, same as torch.round) -> clamp
        q = jnp.clip(jnp.round(x * inv_scale), qmin, qmax)
        acc_ref[2 * s] += jnp.sum(x * q, axis=0)
        acc_ref[2 * s + 1] += jnp.sum(q * q, axis=0)


def _qdq_kernel(sc_ref, x_ref, o_ref, *, bits):
    """output = dequantize(clamp(round(quantize(x)))) with the selected scale."""
    qmin = float(-(1 << (bits - 1)))
    qmax = float((1 << (bits - 1)) - 1)
    scale = sc_ref[0]       # 2**(best_step - bits + 1)
    inv_scale = sc_ref[1]   # exact reciprocal, also a power of two
    q = jnp.clip(jnp.round(x_ref[...].astype(jnp.float32) * inv_scale), qmin, qmax)
    o_ref[...] = (q * scale).astype(o_ref.dtype)


@functools.partial(jax.jit, static_argnums=(1,))
def quantizer_forward(x, bits):
    """Training-mode forward of Quantizer(bits, out_channels) on a fresh module."""
    if bits == 32:
        return x
    assert bits != 1, "Binary quantization is not supported"

    orig_shape = x.shape
    orig_dtype = x.dtype
    n = x.size

    rows = _round_up(max(n, 1), LANES) // LANES
    tile_rows = min(MAX_TILE_ROWS, _round_up(rows, ROW_ALIGN))
    padded_rows = _round_up(rows, NCORES * tile_rows)
    inner_steps = padded_rows // (NCORES * tile_rows)

    # keep original dtype; zero padding contributes 0 to every sum below
    flat = jnp.pad(x.reshape(-1), (0, padded_rows * LANES - n))
    x2d = flat.reshape(padded_rows, LANES)

    # ---- pass 1: per-candidate-step cosine-similarity statistics (hot path) ----
    acc = pl.pallas_call(
        functools.partial(_stats_kernel, bits=bits),
        out_shape=jax.ShapeDtypeStruct((NCORES, 2 * bits + 1, 8, LANES), jnp.float32),
        grid=(NCORES, inner_steps),
        in_specs=[pl.BlockSpec((tile_rows, LANES),
                               lambda c, i: (c * inner_steps + i, 0))],
        out_specs=pl.BlockSpec((None, 2 * bits + 1, 8, LANES),
                               lambda c, i: (c, 0, 0, 0)),
        compiler_params=pltpu.CompilerParams(
            dimension_semantics=("parallel", "arbitrary")),
    )(x2d)

    # glue: finish core/sublane/lane reductions and pick the best step
    stats = jnp.sum(acc, axis=(0, 2, 3))                 # (2*bits+1,)
    steps = jnp.arange(bits, dtype=jnp.float32)
    step_scales = jnp.exp2(steps - (bits - 1))           # 2**s / 2**(bits-1), exact
    dots = stats[0:2 * bits:2] * step_scales             # x . y_s
    ynorms_sq = stats[1:2 * bits:2] * step_scales * step_scales   # ||y_s||^2
    xnorm_sq = stats[2 * bits]                           # ||x||^2
    eps = 1e-8                                           # torch.cosine_similarity eps
    cos = dots / (jnp.maximum(jnp.sqrt(xnorm_sq), eps)
                  * jnp.maximum(jnp.sqrt(ynorms_sq), eps))
    # strict ">" in the torch loop keeps the *first* maximum; jnp.argmax matches.
    best_step = jnp.argmax(cos).astype(jnp.float32)
    # TODO(synk): the persistent self.scale_list voting state across multiple
    # forward calls is module state; a single fresh-module call reduces to argmax.
    scale = jnp.exp2(best_step - (bits - 1))             # 2**step / 2**(bits-1), exact
    inv_scale = jnp.exp2((bits - 1) - best_step)         # exact power-of-two reciprocal
    scale_pair = jnp.stack([scale, inv_scale]).astype(jnp.float32)

    # ---- pass 2: quantize -> round -> clamp -> dequantize with chosen scale ----
    out2d = pl.pallas_call(
        functools.partial(_qdq_kernel, bits=bits),
        out_shape=jax.ShapeDtypeStruct((padded_rows, LANES), orig_dtype),
        grid=(padded_rows // tile_rows,),
        in_specs=[pl.BlockSpec(memory_space=pltpu.MemorySpace.SMEM),
                  pl.BlockSpec((tile_rows, LANES), lambda i: (i, 0))],
        out_specs=pl.BlockSpec((tile_rows, LANES), lambda i: (i, 0)),
        compiler_params=pltpu.CompilerParams(dimension_semantics=("parallel",)),
    )(scale_pair, x2d)

    return out2d.reshape(-1)[:n].reshape(orig_shape)


def _reference_forward(x_np, bits):
    """Pure numpy reference of the torch training-mode forward (fresh module)."""
    qmin = -(1 << (bits - 1))
    qmax = (1 << (bits - 1)) - 1
    qrange = float(max(abs(qmin), abs(qmax)))
    xf = x_np.reshape(-1).astype(np.float64)
    best_cos, best_step = -1.0, 0
    for i in range(bits):
        scale = (2.0 ** i) / qrange
        y = np.clip(np.round(xf / scale), qmin, qmax) * scale  # np.round = half-to-even
        cos = float(np.dot(xf, y) /
                    (max(np.linalg.norm(xf), 1e-8) * max(np.linalg.norm(y), 1e-8)))
        if cos > best_cos:
            best_cos, best_step = cos, i
    scale = (2.0 ** best_step) / qrange
    out = np.clip(np.round(x_np.astype(np.float64) / scale), qmin, qmax) * scale
    return out.astype(x_np.dtype)


if __name__ == "__main__":
    # Quantizer(bits=8, out_channels=4) applied to an NCHW activation tensor.
    bits = 8
    key = jax.random.PRNGKey(0)
    x = jax.random.normal(key, (2, 4, 16, 16), dtype=jnp.float32) * 0.5

    out = quantizer_forward(x, bits)
    out = jax.block_until_ready(out)

    ref = _reference_forward(np.asarray(x), bits)
    np.testing.assert_allclose(np.asarray(out), ref, rtol=1e-5, atol=1e-6)

    print("KERNEL_OK")
</pallas_src>

<mosaic_0001>
module attributes {stable_mosaic.version = 11 : i64} {
  func.func @_stats_kernel(%arg0: i32, %arg1: i32, %arg2: memref<32x128xf32, #tpu.memory_space<vmem>>, %arg3: memref<1x17x8x128xf32, #tpu.memory_space<vmem>>) attributes {dimension_semantics = [#tpu.dimension_semantics<parallel>, #tpu.dimension_semantics<arbitrary>], iteration_bounds = array<i64: 2, 1>, scalar_prefetch = 0 : i64, scratch_operands = 0 : i64, tpu.core_type = #tpu.core_type<tc>, window_params = [{transform_indices = @transform_0, window_bounds = array<i64: 32, 128>}, {transform_indices = @transform_1, window_bounds = array<i64: 1, 17, 8, 128>}]} {
    %c0_i32 = arith.constant 0 : i32
    %0 = arith.cmpi eq, %arg1, %c0_i32 : i32
    %1 = arith.extui %0 : i1 to i32
    %c0_i32_0 = arith.constant 0 : i32
    %2 = arith.cmpi ne, %1, %c0_i32_0 : i32
    scf.if %2 {
      %cst_162 = arith.constant 0.000000e+00 : f32
      %197 = vector.broadcast %cst_162 : f32 to vector<17x8x128xf32>
      %c0_163 = arith.constant 0 : index
      %c0_164 = arith.constant 0 : index
      %c0_165 = arith.constant 0 : index
      %c0_166 = arith.constant 0 : index
      %198 = vector.load %arg3[%c0_163, %c0_164, %c0_165, %c0_166] : memref<1x17x8x128xf32, #tpu.memory_space<vmem>>, vector<1x17x8x128xf32>
      %199 = vector.shape_cast %198 : vector<1x17x8x128xf32> to vector<17x8x128xf32>
      %200 = vector.shape_cast %197 : vector<17x8x128xf32> to vector<1x17x8x128xf32>
      tpu.vector_store %arg3[%c0_163, %c0_164, %c0_165, %c0_166], %200 {strides = array<i32>} : memref<1x17x8x128xf32, #tpu.memory_space<vmem>>, vector<1x17x8x128xf32>,
    } else {
    }
    %c0 = arith.constant 0 : index
    %c0_1 = arith.constant 0 : index
    %3 = vector.load %arg2[%c0, %c0_1] : memref<32x128xf32, #tpu.memory_space<vmem>>, vector<32x128xf32>
    %4 = vector.shape_cast %3 : vector<32x128xf32> to vector<4x8x128xf32>
    %c0_2 = arith.constant 0 : index
    %c16 = arith.constant 16 : index
    %c0_3 = arith.constant 0 : index
    %c0_4 = arith.constant 0 : index
    %5 = vector.load %arg3[%c0_2, %c16, %c0_3, %c0_4] : memref<1x17x8x128xf32, #tpu.memory_space<vmem>>, vector<1x1x8x128xf32>
    %6 = vector.shape_cast %5 : vector<1x1x8x128xf32> to vector<8x128xf32>
    %7 = arith.mulf %4, %4 : vector<4x8x128xf32>
    %cst = arith.constant dense<0.000000e+00> : vector<8x128xf32>
    %8 = vector.multi_reduction <add>, %7, %cst [0] : vector<4x8x128xf32> to vector<8x128xf32>
    %9 = arith.addf %6, %8 : vector<8x128xf32>
    %c0_5 = arith.constant 0 : index
    %c16_6 = arith.constant 16 : index
    %c0_7 = arith.constant 0 : index
    %c0_8 = arith.constant 0 : index
    %10 = vector.load %arg3[%c0_5, %c16_6, %c0_7, %c0_8] : memref<1x17x8x128xf32, #tpu.memory_space<vmem>>, vector<1x1x8x128xf32>
    %11 = vector.shape_cast %10 : vector<1x1x8x128xf32> to vector<8x128xf32>
    %12 = vector.shape_cast %9 : vector<8x128xf32> to vector<1x1x8x128xf32>
    tpu.vector_store %arg3[%c0_5, %c16_6, %c0_7, %c0_8], %12 {strides = array<i32>} : memref<1x17x8x128xf32, #tpu.memory_space<vmem>>, vector<1x1x8x128xf32>,
    %cst_9 = arith.constant 1.280000e+02 : f32
    %13 = vector.broadcast %cst_9 : f32 to vector<4x8x128xf32>
    %14 = arith.mulf %4, %13 : vector<4x8x128xf32>
    %15 = math.roundeven %14 : vector<4x8x128xf32>
    %cst_10 = arith.constant -1.280000e+02 : f32
    %cst_11 = arith.constant 1.270000e+02 : f32
    %16 = vector.broadcast %cst_10 : f32 to vector<4x8x128xf32>
    %17 = arith.maximumf %16, %15 : vector<4x8x128xf32>
    %18 = vector.broadcast %cst_11 : f32 to vector<4x8x128xf32>
    %19 = arith.minimumf %18, %17 : vector<4x8x128xf32>
    %c0_12 = arith.constant 0 : index
    %c0_13 = arith.constant 0 : index
    %c0_14 = arith.constant 0 : index
    %c0_15 = arith.constant 0 : index
    %20 = vector.load %arg3[%c0_12, %c0_13, %c0_14, %c0_15] : memref<1x17x8x128xf32, #tpu.memory_space<vmem>>, vector<1x1x8x128xf32>
    %21 = vector.shape_cast %20 : vector<1x1x8x128xf32> to vector<8x128xf32>
    %22 = arith.mulf %4, %19 : vector<4x8x128xf32>
    %cst_16 = arith.constant dense<0.000000e+00> : vector<8x128xf32>
    %23 = vector.multi_reduction <add>, %22, %cst_16 [0] : vector<4x8x128xf32> to vector<8x128xf32>
    %24 = arith.addf %21, %23 : vector<8x128xf32>
    %c0_17 = arith.constant 0 : index
    %c0_18 = arith.constant 0 : index
    %c0_19 = arith.constant 0 : index
    %c0_20 = arith.constant 0 : index
    %25 = vector.load %arg3[%c0_17, %c0_18, %c0_19, %c0_20] : memref<1x17x8x128xf32, #tpu.memory_space<vmem>>, vector<1x1x8x128xf32>
    %26 = vector.shape_cast %25 : vector<1x1x8x128xf32> to vector<8x128xf32>
    %27 = vector.shape_cast %24 : vector<8x128xf32> to vector<1x1x8x128xf32>
    tpu.vector_store %arg3[%c0_17, %c0_18, %c0_19, %c0_20], %27 {strides = array<i32>} : memref<1x17x8x128xf32, #tpu.memory_space<vmem>>, vector<1x1x8x128xf32>,
    %c0_21 = arith.constant 0 : index
    %c1 = arith.constant 1 : index
    %c0_22 = arith.constant 0 : index
    %c0_23 = arith.constant 0 : index
    %28 = vector.load %arg3[%c0_21, %c1, %c0_22, %c0_23] : memref<1x17x8x128xf32, #tpu.memory_space<vmem>>, vector<1x1x8x128xf32>
    %29 = vector.shape_cast %28 : vector<1x1x8x128xf32> to vector<8x128xf32>
    %30 = arith.mulf %19, %19 : vector<4x8x128xf32>
    %cst_24 = arith.constant dense<0.000000e+00> : vector<8x128xf32>
    %31 = vector.multi_reduction <add>, %30, %cst_24 [0] : vector<4x8x128xf32> to vector<8x128xf32>
    %32 = arith.addf %29, %31 : vector<8x128xf32>
    %c0_25 = arith.constant 0 : index
    %c1_26 = arith.constant 1 : index
    %c0_27 = arith.constant 0 : index
    %c0_28 = arith.constant 0 : index
    %33 = vector.load %arg3[%c0_25, %c1_26, %c0_27, %c0_28] : memref<1x17x8x128xf32, #tpu.memory_space<vmem>>, vector<1x1x8x128xf32>
    %34 = vector.shape_cast %33 : vector<1x1x8x128xf32> to vector<8x128xf32>
    %35 = vector.shape_cast %32 : vector<8x128xf32> to vector<1x1x8x128xf32>
    tpu.vector_store %arg3[%c0_25, %c1_26, %c0_27, %c0_28], %35 {strides = array<i32>} : memref<1x17x8x128xf32, #tpu.memory_space<vmem>>, vector<1x1x8x128xf32>,
    %cst_29 = arith.constant 6.400000e+01 : f32
    %36 = vector.broadcast %cst_29 : f32 to vector<4x8x128xf32>
    %37 = arith.mulf %4, %36 : vector<4x8x128xf32>
    %38 = math.roundeven %37 : vector<4x8x128xf32>
    %cst_30 = arith.constant -1.280000e+02 : f32
    %cst_31 = arith.constant 1.270000e+02 : f32
    %39 = vector.broadcast %cst_30 : f32 to vector<4x8x128xf32>
    %40 = arith.maximumf %39, %38 : vector<4x8x128xf32>
    %41 = vector.broadcast %cst_31 : f32 to vector<4x8x128xf32>
    %42 = arith.minimumf %41, %40 : vector<4x8x128xf32>
    %c0_32 = arith.constant 0 : index
    %c2 = arith.constant 2 : index
    %c0_33 = arith.constant 0 : index
    %c0_34 = arith.constant 0 : index
    %43 = vector.load %arg3[%c0_32, %c2, %c0_33, %c0_34] : memref<1x17x8x128xf32, #tpu.memory_space<vmem>>, vector<1x1x8x128xf32>
    %44 = vector.shape_cast %43 : vector<1x1x8x128xf32> to vector<8x128xf32>
    %45 = arith.mulf %4, %42 : vector<4x8x128xf32>
    %cst_35 = arith.constant dense<0.000000e+00> : vector<8x128xf32>
    %46 = vector.multi_reduction <add>, %45, %cst_35 [0] : vector<4x8x128xf32> to vector<8x128xf32>
    %47 = arith.addf %44, %46 : vector<8x128xf32>
    %c0_36 = arith.constant 0 : index
    %c2_37 = arith.constant 2 : index
    %c0_38 = arith.constant 0 : index
    %c0_39 = arith.constant 0 : index
    %48 = vector.load %arg3[%c0_36, %c2_37, %c0_38, %c0_39] : memref<1x17x8x128xf32, #tpu.memory_space<vmem>>, vector<1x1x8x128xf32>
    %49 = vector.shape_cast %48 : vector<1x1x8x128xf32> to vector<8x128xf32>
    %50 = vector.shape_cast %47 : vector<8x128xf32> to vector<1x1x8x128xf32>
    tpu.vector_store %arg3[%c0_36, %c2_37, %c0_38, %c0_39], %50 {strides = array<i32>} : memref<1x17x8x128xf32, #tpu.memory_space<vmem>>, vector<1x1x8x128xf32>,
    %c0_40 = arith.constant 0 : index
    %c3 = arith.constant 3 : index
    %c0_41 = arith.constant 0 : index
    %c0_42 = arith.constant 0 : index
    %51 = vector.load %arg3[%c0_40, %c3, %c0_41, %c0_42] : memref<1x17x8x128xf32, #tpu.memory_space<vmem>>, vector<1x1x8x128xf32>
    %52 = vector.shape_cast %51 : vector<1x1x8x128xf32> to vector<8x128xf32>
    %53 = arith.mulf %42, %42 : vector<4x8x128xf32>
    %cst_43 = arith.constant dense<0.000000e+00> : vector<8x128xf32>
    %54 = vector.multi_reduction <add>, %53, %cst_43 [0] : vector<4x8x128xf32> to vector<8x128xf32>
    %55 = arith.addf %52, %54 : vector<8x128xf32>
    %c0_44 = arith.constant 0 : index
    %c3_45 = arith.constant 3 : index
    %c0_46 = arith.constant 0 : index
    %c0_47 = arith.constant 0 : index
    %56 = vector.load %arg3[%c0_44, %c3_45, %c0_46, %c0_47] : memref<1x17x8x128xf32, #tpu.memory_space<vmem>>, vector<1x1x8x128xf32>
    %57 = vector.shape_cast %56 : vector<1x1x8x128xf32> to vector<8x128xf32>
    %58 = vector.shape_cast %55 : vector<8x128xf32> to vector<1x1x8x128xf32>
    tpu.vector_store %arg3[%c0_44, %c3_45, %c0_46, %c0_47], %58 {strides = array<i32>} : memref<1x17x8x128xf32, #tpu.memory_space<vmem>>, vector<1x1x8x128xf32>,
    %cst_48 = arith.constant 3.200000e+01 : f32
    %59 = vector.broadcast %cst_48 : f32 to vector<4x8x128xf32>
    %60 = arith.mulf %4, %59 : vector<4x8x128xf32>
    %61 = math.roundeven %60 : vector<4x8x128xf32>
    %cst_49 = arith.constant -1.280000e+02 : f32
    %cst_50 = arith.constant 1.270000e+02 : f32
    %62 = vector.broadcast %cst_49 : f32 to vector<4x8x128xf32>
    %63 = arith.maximumf %62, %61 : vector<4x8x128xf32>
    %64 = vector.broadcast %cst_50 : f32 to vector<4x8x128xf32>
    %65 = arith.minimumf %64, %63 : vector<4x8x128xf32>
    %c0_51 = arith.constant 0 : index
    %c4 = arith.constant 4 : index
    %c0_52 = arith.constant 0 : index
    %c0_53 = arith.constant 0 : index
    %66 = vector.load %arg3[%c0_51, %c4, %c0_52, %c0_53] : memref<1x17x8x128xf32, #tpu.memory_space<vmem>>, vector<1x1x8x128xf32>
    %67 = vector.shape_cast %66 : vector<1x1x8x128xf32> to vector<8x128xf32>
    %68 = arith.mulf %4, %65 : vector<4x8x128xf32>
    %cst_54 = arith.constant dense<0.000000e+00> : vector<8x128xf32>
    %69 = vector.multi_reduction <add>, %68, %cst_54 [0] : vector<4x8x128xf32> to vector<8x128xf32>
    %70 = arith.addf %67, %69 : vector<8x128xf32>
    %c0_55 = arith.constant 0 : index
    %c4_56 = arith.constant 4 : index
    %c0_57 = arith.constant 0 : index
    %c0_58 = arith.constant 0 : index
    %71 = vector.load %arg3[%c0_55, %c4_56, %c0_57, %c0_58] : memref<1x17x8x128xf32, #tpu.memory_space<vmem>>, vector<1x1x8x128xf32>
    %72 = vector.shape_cast %71 : vector<1x1x8x128xf32> to vector<8x128xf32>
    %73 = vector.shape_cast %70 : vector<8x128xf32> to vector<1x1x8x128xf32>
    tpu.vector_store %arg3[%c0_55, %c4_56, %c0_57, %c0_58], %73 {strides = array<i32>} : memref<1x17x8x128xf32, #tpu.memory_space<vmem>>, vector<1x1x8x128xf32>,
    %c0_59 = arith.constant 0 : index
    %c5 = arith.constant 5 : index
    %c0_60 = arith.constant 0 : index
    %c0_61 = arith.constant 0 : index
    %74 = vector.load %arg3[%c0_59, %c5, %c0_60, %c0_61] : memref<1x17x8x128xf32, #tpu.memory_space<vmem>>, vector<1x1x8x128xf32>
    %75 = vector.shape_cast %74 : vector<1x1x8x128xf32> to vector<8x128xf32>
    %76 = arith.mulf %65, %65 : vector<4x8x128xf32>
    %cst_62 = arith.constant dense<0.000000e+00> : vector<8x128xf32>
    %77 = vector.multi_reduction <add>, %76, %cst_62 [0] : vector<4x8x128xf32> to vector<8x128xf32>
    %78 = arith.addf %75, %77 : vector<8x128xf32>
    %c0_63 = arith.constant 0 : index
    %c5_64 = arith.constant 5 : index
    %c0_65 = arith.constant 0 : index
    %c0_66 = arith.constant 0 : index
    %79 = vector.load %arg3[%c0_63, %c5_64, %c0_65, %c0_66] : memref<1x17x8x128xf32, #tpu.memory_space<vmem>>, vector<1x1x8x128xf32>
    %80 = vector.shape_cast %79 : vector<1x1x8x128xf32> to vector<8x128xf32>
    %81 = vector.shape_cast %78 : vector<8x128xf32> to vector<1x1x8x128xf32>
    tpu.vector_store %arg3[%c0_63, %c5_64, %c0_65, %c0_66], %81 {strides = array<i32>} : memref<1x17x8x128xf32, #tpu.memory_space<vmem>>, vector<1x1x8x128xf32>,
    %cst_67 = arith.constant 1.600000e+01 : f32
    %82 = vector.broadcast %cst_67 : f32 to vector<4x8x128xf32>
    %83 = arith.mulf %4, %82 : vector<4x8x128xf32>
    %84 = math.roundeven %83 : vector<4x8x128xf32>
    %cst_68 = arith.constant -1.280000e+02 : f32
    %cst_69 = arith.constant 1.270000e+02 : f32
    %85 = vector.broadcast %cst_68 : f32 to vector<4x8x128xf32>
    %86 = arith.maximumf %85, %84 : vector<4x8x128xf32>
    %87 = vector.broadcast %cst_69 : f32 to vector<4x8x128xf32>
    %88 = arith.minimumf %87, %86 : vector<4x8x128xf32>
    %c0_70 = arith.constant 0 : index
    %c6 = arith.constant 6 : index
    %c0_71 = arith.constant 0 : index
    %c0_72 = arith.constant 0 : index
    %89 = vector.load %arg3[%c0_70, %c6, %c0_71, %c0_72] : memref<1x17x8x128xf32, #tpu.memory_space<vmem>>, vector<1x1x8x128xf32>
    %90 = vector.shape_cast %89 : vector<1x1x8x128xf32> to vector<8x128xf32>
    %91 = arith.mulf %4, %88 : vector<4x8x128xf32>
    %cst_73 = arith.constant dense<0.000000e+00> : vector<8x128xf32>
    %92 = vector.multi_reduction <add>, %91, %cst_73 [0] : vector<4x8x128xf32> to vector<8x128xf32>
    %93 = arith.addf %90, %92 : vector<8x128xf32>
    %c0_74 = arith.constant 0 : index
    %c6_75 = arith.constant 6 : index
    %c0_76 = arith.constant 0 : index
    %c0_77 = arith.constant 0 : index
    %94 = vector.load %arg3[%c0_74, %c6_75, %c0_76, %c0_77] : memref<1x17x8x128xf32, #tpu.memory_space<vmem>>, vector<1x1x8x128xf32>
    %95 = vector.shape_cast %94 : vector<1x1x8x128xf32> to vector<8x128xf32>
    %96 = vector.shape_cast %93 : vector<8x128xf32> to vector<1x1x8x128xf32>
    tpu.vector_store %arg3[%c0_74, %c6_75, %c0_76, %c0_77], %96 {strides = array<i32>} : memref<1x17x8x128xf32, #tpu.memory_space<vmem>>, vector<1x1x8x128xf32>,
    %c0_78 = arith.constant 0 : index
    %c7 = arith.constant 7 : index
    %c0_79 = arith.constant 0 : index
    %c0_80 = arith.constant 0 : index
    %97 = vector.load %arg3[%c0_78, %c7, %c0_79, %c0_80] : memref<1x17x8x128xf32, #tpu.memory_space<vmem>>, vector<1x1x8x128xf32>
    %98 = vector.shape_cast %97 : vector<1x1x8x128xf32> to vector<8x128xf32>
    %99 = arith.mulf %88, %88 : vector<4x8x128xf32>
    %cst_81 = arith.constant dense<0.000000e+00> : vector<8x128xf32>
    %100 = vector.multi_reduction <add>, %99, %cst_81 [0] : vector<4x8x128xf32> to vector<8x128xf32>
    %101 = arith.addf %98, %100 : vector<8x128xf32>
    %c0_82 = arith.constant 0 : index
    %c7_83 = arith.constant 7 : index
    %c0_84 = arith.constant 0 : index
    %c0_85 = arith.constant 0 : index
    %102 = vector.load %arg3[%c0_82, %c7_83, %c0_84, %c0_85] : memref<1x17x8x128xf32, #tpu.memory_space<vmem>>, vector<1x1x8x128xf32>
    %103 = vector.shape_cast %102 : vector<1x1x8x128xf32> to vector<8x128xf32>
    %104 = vector.shape_cast %101 : vector<8x128xf32> to vector<1x1x8x128xf32>
    tpu.vector_store %arg3[%c0_82, %c7_83, %c0_84, %c0_85], %104 {strides = array<i32>} : memref<1x17x8x128xf32, #tpu.memory_space<vmem>>, vector<1x1x8x128xf32>,
    %cst_86 = arith.constant 8.000000e+00 : f32
    %105 = vector.broadcast %cst_86 : f32 to vector<4x8x128xf32>
    %106 = arith.mulf %4, %105 : vector<4x8x128xf32>
    %107 = math.roundeven %106 : vector<4x8x128xf32>
    %cst_87 = arith.constant -1.280000e+02 : f32
    %cst_88 = arith.constant 1.270000e+02 : f32
    %108 = vector.broadcast %cst_87 : f32 to vector<4x8x128xf32>
    %109 = arith.maximumf %108, %107 : vector<4x8x128xf32>
    %110 = vector.broadcast %cst_88 : f32 to vector<4x8x128xf32>
    %111 = arith.minimumf %110, %109 : vector<4x8x128xf32>
    %c0_89 = arith.constant 0 : index
    %c8 = arith.constant 8 : index
    %c0_90 = arith.constant 0 : index
    %c0_91 = arith.constant 0 : index
    %112 = vector.load %arg3[%c0_89, %c8, %c0_90, %c0_91] : memref<1x17x8x128xf32, #tpu.memory_space<vmem>>, vector<1x1x8x128xf32>
    %113 = vector.shape_cast %112 : vector<1x1x8x128xf32> to vector<8x128xf32>
    %114 = arith.mulf %4, %111 : vector<4x8x128xf32>
    %cst_92 = arith.constant dense<0.000000e+00> : vector<8x128xf32>
    %115 = vector.multi_reduction <add>, %114, %cst_92 [0] : vector<4x8x128xf32> to vector<8x128xf32>
    %116 = arith.addf %113, %115 : vector<8x128xf32>
    %c0_93 = arith.constant 0 : index
    %c8_94 = arith.constant 8 : index
    %c0_95 = arith.constant 0 : index
    %c0_96 = arith.constant 0 : index
    %117 = vector.load %arg3[%c0_93, %c8_94, %c0_95, %c0_96] : memref<1x17x8x128xf32, #tpu.memory_space<vmem>>, vector<1x1x8x128xf32>
    %118 = vector.shape_cast %117 : vector<1x1x8x128xf32> to vector<8x128xf32>
    %119 = vector.shape_cast %116 : vector<8x128xf32> to vector<1x1x8x128xf32>
    tpu.vector_store %arg3[%c0_93, %c8_94, %c0_95, %c0_96], %119 {strides = array<i32>} : memref<1x17x8x128xf32, #tpu.memory_space<vmem>>, vector<1x1x8x128xf32>,
    %c0_97 = arith.constant 0 : index
    %c9 = arith.constant 9 : index
    %c0_98 = arith.constant 0 : index
    %c0_99 = arith.constant 0 : index
    %120 = vector.load %arg3[%c0_97, %c9, %c0_98, %c0_99] : memref<1x17x8x128xf32, #tpu.memory_space<vmem>>, vector<1x1x8x128xf32>
    %121 = vector.shape_cast %120 : vector<1x1x8x128xf32> to vector<8x128xf32>
    %122 = arith.mulf %111, %111 : vector<4x8x128xf32>
    %cst_100 = arith.constant dense<0.000000e+00> : vector<8x128xf32>
    %123 = vector.multi_reduction <add>, %122, %cst_100 [0] : vector<4x8x128xf32> to vector<8x128xf32>
    %124 = arith.addf %121, %123 : vector<8x128xf32>
    %c0_101 = arith.constant 0 : index
    %c9_102 = arith.constant 9 : index
    %c0_103 = arith.constant 0 : index
    %c0_104 = arith.constant 0 : index
    %125 = vector.load %arg3[%c0_101, %c9_102, %c0_103, %c0_104] : memref<1x17x8x128xf32, #tpu.memory_space<vmem>>, vector<1x1x8x128xf32>
    %126 = vector.shape_cast %125 : vector<1x1x8x128xf32> to vector<8x128xf32>
    %127 = vector.shape_cast %124 : vector<8x128xf32> to vector<1x1x8x128xf32>
    tpu.vector_store %arg3[%c0_101, %c9_102, %c0_103, %c0_104], %127 {strides = array<i32>} : memref<1x17x8x128xf32, #tpu.memory_space<vmem>>, vector<1x1x8x128xf32>,
    %cst_105 = arith.constant 4.000000e+00 : f32
    %128 = vector.broadcast %cst_105 : f32 to vector<4x8x128xf32>
    %129 = arith.mulf %4, %128 : vector<4x8x128xf32>
    %130 = math.roundeven %129 : vector<4x8x128xf32>
    %cst_106 = arith.constant -1.280000e+02 : f32
    %cst_107 = arith.constant 1.270000e+02 : f32
    %131 = vector.broadcast %cst_106 : f32 to vector<4x8x128xf32>
    %132 = arith.maximumf %131, %130 : vector<4x8x128xf32>
    %133 = vector.broadcast %cst_107 : f32 to vector<4x8x128xf32>
    %134 = arith.minimumf %133, %132 : vector<4x8x128xf32>
    %c0_108 = arith.constant 0 : index
    %c10 = arith.constant 10 : index
    %c0_109 = arith.constant 0 : index
    %c0_110 = arith.constant 0 : index
    %135 = vector.load %arg3[%c0_108, %c10, %c0_109, %c0_110] : memref<1x17x8x128xf32, #tpu.memory_space<vmem>>, vector<1x1x8x128xf32>
    %136 = vector.shape_cast %135 : vector<1x1x8x128xf32> to vector<8x128xf32>
    %137 = arith.mulf %4, %134 : vector<4x8x128xf32>
    %cst_111 = arith.constant dense<0.000000e+00> : vector<8x128xf32>
    %138 = vector.multi_reduction <add>, %137, %cst_111 [0] : vector<4x8x128xf32> to vector<8x128xf32>
    %139 = arith.addf %136, %138 : vector<8x128xf32>
    %c0_112 = arith.constant 0 : index
    %c10_113 = arith.constant 10 : index
    %c0_114 = arith.constant 0 : index
    %c0_115 = arith.constant 0 : index
    %140 = vector.load %arg3[%c0_112, %c10_113, %c0_114, %c0_115] : memref<1x17x8x128xf32, #tpu.memory_space<vmem>>, vector<1x1x8x128xf32>
    %141 = vector.shape_cast %140 : vector<1x1x8x128xf32> to vector<8x128xf32>
    %142 = vector.shape_cast %139 : vector<8x128xf32> to vector<1x1x8x128xf32>
    tpu.vector_store %arg3[%c0_112, %c10_113, %c0_114, %c0_115], %142 {strides = array<i32>} : memref<1x17x8x128xf32, #tpu.memory_space<vmem>>, vector<1x1x8x128xf32>,
    %c0_116 = arith.constant 0 : index
    %c11 = arith.constant 11 : index
    %c0_117 = arith.constant 0 : index
    %c0_118 = arith.constant 0 : index
    %143 = vector.load %arg3[%c0_116, %c11, %c0_117, %c0_118] : memref<1x17x8x128xf32, #tpu.memory_space<vmem>>, vector<1x1x8x128xf32>
    %144 = vector.shape_cast %143 : vector<1x1x8x128xf32> to vector<8x128xf32>
    %145 = arith.mulf %134, %134 : vector<4x8x128xf32>
    %cst_119 = arith.constant dense<0.000000e+00> : vector<8x128xf32>
    %146 = vector.multi_reduction <add>, %145, %cst_119 [0] : vector<4x8x128xf32> to vector<8x128xf32>
    %147 = arith.addf %144, %146 : vector<8x128xf32>
    %c0_120 = arith.constant 0 : index
    %c11_121 = arith.constant 11 : index
    %c0_122 = arith.constant 0 : index
    %c0_123 = arith.constant 0 : index
    %148 = vector.load %arg3[%c0_120, %c11_121, %c0_122, %c0_123] : memref<1x17x8x128xf32, #tpu.memory_space<vmem>>, vector<1x1x8x128xf32>
    %149 = vector.shape_cast %148 : vector<1x1x8x128xf32> to vector<8x128xf32>
    %150 = vector.shape_cast %147 : vector<8x128xf32> to vector<1x1x8x128xf32>
    tpu.vector_store %arg3[%c0_120, %c11_121, %c0_122, %c0_123], %150 {strides = array<i32>} : memref<1x17x8x128xf32, #tpu.memory_space<vmem>>, vector<1x1x8x128xf32>,
    %cst_124 = arith.constant 2.000000e+00 : f32
    %151 = vector.broadcast %cst_124 : f32 to vector<4x8x128xf32>
    %152 = arith.mulf %4, %151 : vector<4x8x128xf32>
    %153 = math.roundeven %152 : vector<4x8x128xf32>
    %cst_125 = arith.constant -1.280000e+02 : f32
    %cst_126 = arith.constant 1.270000e+02 : f32
    %154 = vector.broadcast %cst_125 : f32 to vector<4x8x128xf32>
    %155 = arith.maximumf %154, %153 : vector<4x8x128xf32>
    %156 = vector.broadcast %cst_126 : f32 to vector<4x8x128xf32>
    %157 = arith.minimumf %156, %155 : vector<4x8x128xf32>
    %c0_127 = arith.constant 0 : index
    %c12 = arith.constant 12 : index
    %c0_128 = arith.constant 0 : index
    %c0_129 = arith.constant 0 : index
    %158 = vector.load %arg3[%c0_127, %c12, %c0_128, %c0_129] : memref<1x17x8x128xf32, #tpu.memory_space<vmem>>, vector<1x1x8x128xf32>
    %159 = vector.shape_cast %158 : vector<1x1x8x128xf32> to vector<8x128xf32>
    %160 = arith.mulf %4, %157 : vector<4x8x128xf32>
    %cst_130 = arith.constant dense<0.000000e+00> : vector<8x128xf32>
    %161 = vector.multi_reduction <add>, %160, %cst_130 [0] : vector<4x8x128xf32> to vector<8x128xf32>
    %162 = arith.addf %159, %161 : vector<8x128xf32>
    %c0_131 = arith.constant 0 : index
    %c12_132 = arith.constant 12 : index
    %c0_133 = arith.constant 0 : index
    %c0_134 = arith.constant 0 : index
    %163 = vector.load %arg3[%c0_131, %c12_132, %c0_133, %c0_134] : memref<1x17x8x128xf32, #tpu.memory_space<vmem>>, vector<1x1x8x128xf32>
    %164 = vector.shape_cast %163 : vector<1x1x8x128xf32> to vector<8x128xf32>
    %165 = vector.shape_cast %162 : vector<8x128xf32> to vector<1x1x8x128xf32>
    tpu.vector_store %arg3[%c0_131, %c12_132, %c0_133, %c0_134], %165 {strides = array<i32>} : memref<1x17x8x128xf32, #tpu.memory_space<vmem>>, vector<1x1x8x128xf32>,
    %c0_135 = arith.constant 0 : index
    %c13 = arith.constant 13 : index
    %c0_136 = arith.constant 0 : index
    %c0_137 = arith.constant 0 : index
    %166 = vector.load %arg3[%c0_135, %c13, %c0_136, %c0_137] : memref<1x17x8x128xf32, #tpu.memory_space<vmem>>, vector<1x1x8x128xf32>
    %167 = vector.shape_cast %166 : vector<1x1x8x128xf32> to vector<8x128xf32>
    %168 = arith.mulf %157, %157 : vector<4x8x128xf32>
    %cst_138 = arith.constant dense<0.000000e+00> : vector<8x128xf32>
    %169 = vector.multi_reduction <add>, %168, %cst_138 [0] : vector<4x8x128xf32> to vector<8x128xf32>
    %170 = arith.addf %167, %169 : vector<8x128xf32>
    %c0_139 = arith.constant 0 : index
    %c13_140 = arith.constant 13 : index
    %c0_141 = arith.constant 0 : index
    %c0_142 = arith.constant 0 : index
    %171 = vector.load %arg3[%c0_139, %c13_140, %c0_141, %c0_142] : memref<1x17x8x128xf32, #tpu.memory_space<vmem>>, vector<1x1x8x128xf32>
    %172 = vector.shape_cast %171 : vector<1x1x8x128xf32> to vector<8x128xf32>
    %173 = vector.shape_cast %170 : vector<8x128xf32> to vector<1x1x8x128xf32>
    tpu.vector_store %arg3[%c0_139, %c13_140, %c0_141, %c0_142], %173 {strides = array<i32>} : memref<1x17x8x128xf32, #tpu.memory_space<vmem>>, vector<1x1x8x128xf32>,
    %cst_143 = arith.constant 1.000000e+00 : f32
    %174 = vector.broadcast %cst_143 : f32 to vector<4x8x128xf32>
    %175 = arith.mulf %4, %174 : vector<4x8x128xf32>
    %176 = math.roundeven %175 : vector<4x8x128xf32>
    %cst_144 = arith.constant -1.280000e+02 : f32
    %cst_145 = arith.constant 1.270000e+02 : f32
    %177 = vector.broadcast %cst_144 : f32 to vector<4x8x128xf32>
    %178 = arith.maximumf %177, %176 : vector<4x8x128xf32>
    %179 = vector.broadcast %cst_145 : f32 to vector<4x8x128xf32>
    %180 = arith.minimumf %179, %178 : vector<4x8x128xf32>
    %c0_146 = arith.constant 0 : index
    %c14 = arith.constant 14 : index
    %c0_147 = arith.constant 0 : index
    %c0_148 = arith.constant 0 : index
    %181 = vector.load %arg3[%c0_146, %c14, %c0_147, %c0_148] : memref<1x17x8x128xf32, #tpu.memory_space<vmem>>, vector<1x1x8x128xf32>
    %182 = vector.shape_cast %181 : vector<1x1x8x128xf32> to vector<8x128xf32>
    %183 = arith.mulf %4, %180 : vector<4x8x128xf32>
    %cst_149 = arith.constant dense<0.000000e+00> : vector<8x128xf32>
    %184 = vector.multi_reduction <add>, %183, %cst_149 [0] : vector<4x8x128xf32> to vector<8x128xf32>
    %185 = arith.addf %182, %184 : vector<8x128xf32>
    %c0_150 = arith.constant 0 : index
    %c14_151 = arith.constant 14 : index
    %c0_152 = arith.constant 0 : index
    %c0_153 = arith.constant 0 : index
    %186 = vector.load %arg3[%c0_150, %c14_151, %c0_152, %c0_153] : memref<1x17x8x128xf32, #tpu.memory_space<vmem>>, vector<1x1x8x128xf32>
    %187 = vector.shape_cast %186 : vector<1x1x8x128xf32> to vector<8x128xf32>
    %188 = vector.shape_cast %185 : vector<8x128xf32> to vector<1x1x8x128xf32>
    tpu.vector_store %arg3[%c0_150, %c14_151, %c0_152, %c0_153], %188 {strides = array<i32>} : memref<1x17x8x128xf32, #tpu.memory_space<vmem>>, vector<1x1x8x128xf32>,
    %c0_154 = arith.constant 0 : index
    %c15 = arith.constant 15 : index
    %c0_155 = arith.constant 0 : index
    %c0_156 = arith.constant 0 : index
    %189 = vector.load %arg3[%c0_154, %c15, %c0_155, %c0_156] : memref<1x17x8x128xf32, #tpu.memory_space<vmem>>, vector<1x1x8x128xf32>
    %190 = vector.shape_cast %189 : vector<1x1x8x128xf32> to vector<8x128xf32>
    %191 = arith.mulf %180, %180 : vector<4x8x128xf32>
    %cst_157 = arith.constant dense<0.000000e+00> : vector<8x128xf32>
    %192 = vector.multi_reduction <add>, %191, %cst_157 [0] : vector<4x8x128xf32> to vector<8x128xf32>
    %193 = arith.addf %190, %192 : vector<8x128xf32>
    %c0_158 = arith.constant 0 : index
    %c15_159 = arith.constant 15 : index
    %c0_160 = arith.constant 0 : index
    %c0_161 = arith.constant 0 : index
    %194 = vector.load %arg3[%c0_158, %c15_159, %c0_160, %c0_161] : memref<1x17x8x128xf32, #tpu.memory_space<vmem>>, vector<1x1x8x128xf32>
    %195 = vector.shape_cast %194 : vector<1x1x8x128xf32> to vector<8x128xf32>
    %196 = vector.shape_cast %193 : vector<8x128xf32> to vector<1x1x8x128xf32>
    tpu.vector_store %arg3[%c0_158, %c15_159, %c0_160, %c0_161], %196 {strides = array<i32>} : memref<1x17x8x128xf32, #tpu.memory_space<vmem>>, vector<1x1x8x128xf32>,
    return
  }
  func.func @transform_0(%arg0: i32, %arg1: i32) -> (i32, i32) {
    %c1_i32 = arith.constant 1 : i32
    %0 = arith.muli %arg0, %c1_i32 : i32
    %1 = arith.addi %0, %arg1 : i32
    %c0_i32 = arith.constant 0 : i32
    %c0_i32_0 = arith.constant 0 : i32
    return %1, %c0_i32 : i32, i32
  }
  func.func @transform_1(%arg0: i32, %arg1: i32) -> (i32, i32, i32, i32) {
    %c0_i32 = arith.constant 0 : i32
    %c0_i32_0 = arith.constant 0 : i32
    %c0_i32_1 = arith.constant 0 : i32
    %c0_i32_2 = arith.constant 0 : i32
    return %arg0, %c0_i32, %c0_i32_0, %c0_i32_1 : i32, i32, i32, i32
  }
}

module attributes {stable_mosaic.version = 11 : i64} {
  func.func @_qdq_kernel(%arg0: i32, %arg1: memref<2xf32, #tpu.memory_space<smem>>, %arg2: memref<32x128xf32, #tpu.memory_space<vmem>>, %arg3: memref<32x128xf32, #tpu.memory_space<vmem>>) attributes {dimension_semantics = [#tpu.dimension_semantics<parallel>], iteration_bounds = array<i64: 2>, scalar_prefetch = 0 : i64, scratch_operands = 0 : i64, tpu.core_type = #tpu.core_type<tc>, window_params = [{transform_indices = @transform_0, window_bounds = array<i64: 2>}, {transform_indices = @transform_1, window_bounds = array<i64: 32, 128>}, {transform_indices = @transform_2, window_bounds = array<i64: 32, 128>}]} {
    %c0 = arith.constant 0 : index
    %0 = memref.load %arg1[%c0] : memref<2xf32, #tpu.memory_space<smem>>
    %c1 = arith.constant 1 : index
    %1 = memref.load %arg1[%c1] : memref<2xf32, #tpu.memory_space<smem>>
    %c0_0 = arith.constant 0 : index
    %c0_1 = arith.constant 0 : index
    %2 = vector.load %arg2[%c0_0, %c0_1] : memref<32x128xf32, #tpu.memory_space<vmem>>, vector<32x128xf32>
    %3 = vector.broadcast %1 : f32 to vector<32x128xf32>
    %4 = arith.mulf %2, %3 : vector<32x128xf32>
    %5 = math.roundeven %4 : vector<32x128xf32>
    %cst = arith.constant -1.280000e+02 : f32
    %cst_2 = arith.constant 1.270000e+02 : f32
    %6 = vector.broadcast %cst : f32 to vector<32x128xf32>
    %7 = arith.maximumf %6, %5 : vector<32x128xf32>
    %8 = vector.broadcast %cst_2 : f32 to vector<32x128xf32>
    %9 = arith.minimumf %8, %7 : vector<32x128xf32>
    %10 = vector.broadcast %0 : f32 to vector<32x128xf32>
    %11 = arith.mulf %9, %10 : vector<32x128xf32>
    %c0_3 = arith.constant 0 : index
    %c0_4 = arith.constant 0 : index
    %12 = vector.load %arg3[%c0_3, %c0_4] : memref<32x128xf32, #tpu.memory_space<vmem>>, vector<32x128xf32>
    tpu.vector_store %arg3[%c0_3, %c0_4], %11 {strides = array<i32>} : memref<32x128xf32, #tpu.memory_space<vmem>>, vector<32x128xf32>,
    return
  }
  func.func @transform_0(%arg0: i32) -> i32 {
    %c0_i32 = arith.constant 0 : i32
    %c0_i32_0 = arith.constant 0 : i32
    return %c0_i32 : i32
  }
  func.func @transform_1(%arg0: i32) -> (i32, i32) {
    %c0_i32 = arith.constant 0 : i32
    %c0_i32_0 = arith.constant 0 : i32
    return %arg0, %c0_i32 : i32, i32
  }
  func.func @transform_2(%arg0: i32) -> (i32, i32) {
    %c0_i32 = arith.constant 0 : i32
    %c0_i32_0 = arith.constant 0 : i32
    return %arg0, %c0_i32 : i32, i32
  }
}

</mosaic_0001>

<llo_original>
// kernel: quantizer_forward.3
$region0: #{quantizer_forward.3}
  #allocation0 [shape = 'u32[]', space=smem, size = 0x4, offset = 0x4, fixed_abs, tag = 'smem constant byte address 0x4 - core index']
  #allocation1 [shape = 'u32[144,128]{1,0:T(1,128)}', space=vmem, size = 0x12000, scoped, tag = 'internal scratch']
  %s0 = inlined_call_operand.vmem [shape: f32[2], index: 0, kind: input, shape index: {}]
  %s1 = inlined_call_operand.vmem [shape: f32[64,128], index: 1, kind: input, shape index: {}]
  %s2 = inlined_call_operand.vmem [shape: f32[64,128], index: 2, kind: output, shape index: {}]
  %s3 = sld [smem:[#allocation0]]
  $region45: #{quantizer_forward.3} parent=0
    _
  %s5 = ssub.s32 1, %s3
  %s6 = scalar_select 0, %s5, %s3
  $region1: #{quantizer_forward.3} parent=0
    #allocation2 [shape = 'u8[512]{0}', space=smem, size = 0x200, scoped, tag = 'input window, operand 0, single buffered']
    #allocation3 [shape = 's32[2]{0}', space=sflag, size = 0x8, scoped, tag = 'scoped memory for quantizer_forward.3']
    %7 = vsyncpa [#allocation3], 0
    loop: start=0, step=1, limit=4
    $region2: #{quantizer_forward.3} parent=1 // loop_pre_header
      _
    $region3: #{quantizer_forward.3} parent=1 // loop_header
      %s9 = sphi 0, %s13
      %p10 = scmp.ge.s32.totalorder %s9, 4
      %s17 = sphi 0, %s17
      %s19 = sphi 0, %s17
      %s20 = sphi 0, %s19
      %s34 = sphi 0, %s20
      %s40 = sphi 0, %s42
      %s43 = sphi 0, %s40
      %s44 = sphi 0, %s43
      %s60 = sphi 0, %s44
      %s66 = sphi 0, %s68
      %s69 = sphi 0, %s66
      %s70 = sphi 0, %s69
      %s86 = sphi 0, %s70
    $region4: #{quantizer_forward.3} parent=1 // loop_header_branch
      %12 = sbr.rel (%p10) target = $region8
    $region5: #{quantizer_forward.3} parent=1 // loop_body
      %s14 = ssub.s32 %s9, 1
      %s15 = ssub.s32 %s9, 2
      %s16 = sadd.s32 %s9, 1
      %s18 = sadd.s32 %s17, 1
      %p21 = scmp.eq.s32.totalorder %s9, 1
      %p22 = scmp.ne.s32.totalorder %s17, %s19
      %p23 = scmp.eq.s32.totalorder %s9, 0
      %p24 = por %p22, %p23
      %p25 = scmp.ne.s32.totalorder %s17, %s19
      %p26 = scmp.eq.s32.totalorder %s14, 1
      %p27 = por %p25, %p26
      %p28 = scmp.ne.s32.totalorder %s19, %s20
      %p29 = scmp.eq.s32.totalorder %s14, 0
      %p30 = por %p28, %p29
      %p31 = scmp.ne.s32.totalorder %s19, %s20
      %p32 = scmp.eq.s32.totalorder %s15, 1
      %p33 = por %p31, %p32
      %p35 = scmp.ne.s32.totalorder %s20, %s34
      %p36 = scmp.eq.s32.totalorder %s15, 0
      %p37 = por %p35, %p36
      %s38 = ssub.s32 %s9, %s16
      %p39 = scmp.eq.s32.totalorder %s38, 0
      %s41 = sadd.s32 %s40, 1
      %s42 = scalar_select %p39, %s40, %s41
      %p45 = pneg %p39
      %p46 = scmp.eq.s32.totalorder %s9, 1
      %p47 = por %p45, %p46
      %p48 = scmp.ne.s32.totalorder %s40, %s43
      %p49 = scmp.eq.s32.totalorder %s9, 0
      %p50 = por %p48, %p49
      %p51 = scmp.ne.s32.totalorder %s40, %s43
      %p52 = scmp.eq.s32.totalorder %s14, 1
      %p53 = por %p51, %p52
      %p54 = scmp.ne.s32.totalorder %s43, %s44
      %p55 = scmp.eq.s32.totalorder %s14, 0
      %p56 = por %p54, %p55
      %p57 = scmp.ne.s32.totalorder %s43, %s44
      %p58 = scmp.eq.s32.totalorder %s15, 1
      %p59 = por %p57, %p58
      %p61 = scmp.ne.s32.totalorder %s44, %s60
      %p62 = scmp.eq.s32.totalorder %s15, 0
      %p63 = por %p61, %p62
      %s64 = ssub.s32 %s9, %s16
      %p65 = scmp.eq.s32.totalorder %s64, 0
      %s67 = sadd.s32 %s66, 1
      %s68 = scalar_select %p65, %s66, %s67
      %p71 = pneg %p65
      %p72 = scmp.eq.s32.totalorder %s9, 1
      %p73 = por %p71, %p72
      %p74 = scmp.ne.s32.totalorder %s66, %s69
      %p75 = scmp.eq.s32.totalorder %s9, 0
      %p76 = por %p74, %p75
      %p77 = scmp.ne.s32.totalorder %s66, %s69
      %p78 = scmp.eq.s32.totalorder %s14, 1
      %p79 = por %p77, %p78
      %p80 = scmp.ne.s32.totalorder %s69, %s70
      %p81 = scmp.eq.s32.totalorder %s14, 0
      %p82 = por %p80, %p81
      %p83 = scmp.ne.s32.totalorder %s69, %s70
      %p84 = scmp.eq.s32.totalorder %s15, 1
      %p85 = por %p83, %p84
      %p87 = scmp.ne.s32.totalorder %s70, %s86
      %p88 = scmp.eq.s32.totalorder %s15, 0
      %p89 = por %p87, %p88
      %p90 = scmp.le.s32.totalorder 1, %s9
      %p91 = scmp.lt.s32.totalorder %s9, 3
      %p92 = pnand %p90, %p91
      %p93 = pneg %p92
      // Predicated region
      $region9: #{quantizer_forward.3} parent=5 // pred_check
        _
      $region10: #{quantizer_forward.3} parent=5 // pred_check_branch
        %95 = sbr.rel (%p92) target = $region12
      $region11: #{quantizer_forward.3} parent=5 // pred_region
        %s96 = ssub.s32 %s9, 1
        // Predicated region
        $region13: #{quantizer_forward.3} parent=11 // pred_check
          %p97 = pneg %p30
        $region14: #{quantizer_forward.3} parent=11 // pred_check_branch
          %99 = sbr.rel (%p97) target = $region16
        $region15: #{quantizer_forward.3} parent=11 // pred_region
          %s101 = ssub.s32 16, 16
          %102 = vsyncadd [#allocation3], %s101
          %s104 = sshll.u32 %s0, 4
          %s105 = int_to_ptr.vmem [resolvable:$true] %s104
          %107 = dma.vmem_to_smem %s105, 16, [#allocation2], [#allocation3]
        $region16: #{quantizer_forward.3} parent=11 // pred_fallthru
          _
      $region12: #{quantizer_forward.3} parent=5 // pred_fallthru
        _
      %p108 = scmp.lt.s32.totalorder %s9, 2
      // Predicated region
      $region17: #{quantizer_forward.3} parent=5 // pred_check
        %p109 = pneg %p108
      $region18: #{quantizer_forward.3} parent=5 // pred_check_branch
        %111 = sbr.rel (%p109) target = $region20
      $region19: #{quantizer_forward.3} parent=5 // pred_region
        // Predicated region
        $region21: #{quantizer_forward.3} parent=19 // pred_check
          %p112 = pneg %p50
        $region22: #{quantizer_forward.3} parent=19 // pred_check_branch
          %114 = sbr.rel (%p112) target = $region24
        $region23: #{quantizer_forward.3} parent=19 // pred_region
          %s115 = smul.u32 4, %s9
          %p116 = scmp.lt.s32.totalorder %s115, 7
          %s117 = scalar_select %p116, %s115, 7
          %s118 = smul.addr %s117, 8
          %s119 = scalar_lea.vmem %s1, %s118
          %s120 = smul.u32 4, %s9
        $region24: #{quantizer_forward.3} parent=19 // pred_fallthru
          _
      $region20: #{quantizer_forward.3} parent=5 // pred_fallthru
        _
      %p121 = scmp.le.s32.totalorder 1, %s9
      %p122 = scmp.lt.s32.totalorder %s9, 3
      %p123 = pnand %p121, %p122
      %p124 = pneg %p123
      // Predicated region
      $region25: #{quantizer_forward.3} parent=5 // pred_check
        _
      $region26: #{quantizer_forward.3} parent=5 // pred_check_branch
        %126 = sbr.rel (%p123) target = $region28
      $region27: #{quantizer_forward.3} parent=5 // pred_region
        %s127 = ssub.s32 %s9, 1
        // Predicated region
        $region29: #{quantizer_forward.3} parent=27 // pred_check
          %p128 = pneg %p30
        $region30: #{quantizer_forward.3} parent=27 // pred_check_branch
          %130 = sbr.rel (%p128) target = $region32
        $region31: #{quantizer_forward.3} parent=27 // pred_region
          %131 = dma.done [#allocation3], 16
        $region32: #{quantizer_forward.3} parent=27 // pred_fallthru
          _
        %132 = sfence
        %p133 = pneg %p30
        %p134 = pneg %p27
        %s135 = smul.u32 4, %s14
        %p136 = scmp.lt.s32.totalorder %s135, 7
        %s137 = scalar_select %p136, %s135, 7
        %s138 = smul.addr %s137, 8
        %s139 = scalar_lea.vmem %s1, %s138
        %p140 = pneg %p56
        %p141 = pneg %p53
        %p142 = pneg %p82
        %p143 = pneg %p79
        %s144 = smul.u32 4, %s14
        %p145 = scmp.lt.s32.totalorder %s144, 7
        %s146 = scalar_select %p145, %s144, 7
        %s147 = smul.addr %s146, 8
        %s148 = scalar_lea.vmem %s2, %s147
        %s149 = smul.u32 4, %s14
        %p150 = scmp.lt.s32.totalorder %s149, 7
        %s151 = scalar_select %p150, %s149, 7
        %s152 = smul.addr %s151, 8
        %s153 = scalar_lea.vmem %s1, %s152
        %s154 = smul.u32 4, %s14
        %s155 = smul.u32 4, %s14
        %p156 = scmp.lt.s32.totalorder %s155, 7
        %s157 = scalar_select %p156, %s155, 7
        %s158 = smul.addr %s157, 8
        %s159 = scalar_lea.vmem %s2, %s158
        %s160 = smul.u32 4, %s14
        %s161 = sld [smem:[#allocation2]]
        %s162 = sld [smem:[#allocation2 + $0x1]]
        %v163 = vld [vmem:[%s153] sm:$0xff]
        %v164 = vld [vmem:[%s153 + $0x8] sm:$0xff]
        %v165 = vld [vmem:[%s153 + $0x10] sm:$0xff]
        %v166 = vld [vmem:[%s153 + $0x18] sm:$0xff]
        %v167 = vstv %s162
        %v168 = vmul.f32 %v163, %v167
        %v169 = vmul.f32 %v164, %v167
        %v170 = vmul.f32 %v165, %v167
        %v171 = vmul.f32 %v166, %v167
        %v172 = vround.ne.pseudo %v168
        %v173 = vround.ne.pseudo %v169
        %v174 = vround.ne.pseudo %v170
        %v175 = vround.ne.pseudo %v171
        %v176 = vmax.f32 %v172, -128.0
        %v177 = vmax.f32 %v173, -128.0
        %v178 = vmax.f32 %v174, -128.0
        %v179 = vmax.f32 %v175, -128.0
        %v180 = vmin.f32 %v176, 127.0
        %v181 = vmin.f32 %v177, 127.0
        %v182 = vmin.f32 %v178, 127.0
        %v183 = vmin.f32 %v179, 127.0
        %v184 = vstv %s161
        %v185 = vmul.f32 %v180, %v184
        %v186 = vmul.f32 %v181, %v184
        %v187 = vmul.f32 %v182, %v184
        %v188 = vmul.f32 %v183, %v184
        %189 = vst [vmem:[%s159] sm:$0xff] %v185
        %190 = vst [vmem:[%s159 + $0x8] sm:$0xff] %v186
        %191 = vst [vmem:[%s159 + $0x10] sm:$0xff] %v187
        %192 = vst [vmem:[%s159 + $0x18] sm:$0xff] %v188
        %s193 = smul.u32 4, %s14
        %p194 = scmp.lt.s32.totalorder %s193, 7
        %s195 = scalar_select %p194, %s193, 7
        %s196 = smul.addr %s195, 8
        %s197 = scalar_lea.vmem %s2, %s196
        // Predicated region
        $region33: #{quantizer_forward.3} parent=27 // pred_check
          %p198 = pneg %p79
        $region34: #{quantizer_forward.3} parent=27 // pred_check_branch
          %200 = sbr.rel (%p198) target = $region36
        $region35: #{quantizer_forward.3} parent=27 // pred_region
          %s201 = smul.u32 4, %s14
        $region36: #{quantizer_forward.3} parent=27 // pred_fallthru
          _
      $region28: #{quantizer_forward.3} parent=5 // pred_fallthru
        _
      %p202 = scmp.le.s32.totalorder 2, %s9
      // Predicated region
      $region37: #{quantizer_forward.3} parent=5 // pred_check
        %p203 = pneg %p202
      $region38: #{quantizer_forward.3} parent=5 // pred_check_branch
        %205 = sbr.rel (%p203) target = $region40
      $region39: #{quantizer_forward.3} parent=5 // pred_region
        %s206 = ssub.s32 %s9, 2
        // Predicated region
        $region41: #{quantizer_forward.3} parent=39 // pred_check
          %p207 = pneg %p85
        $region42: #{quantizer_forward.3} parent=39 // pred_check_branch
          %209 = sbr.rel (%p207) target = $region44
        $region43: #{quantizer_forward.3} parent=39 // pred_region
          %s210 = smul.u32 4, %s15
          %p211 = scmp.lt.s32.totalorder %s210, 7
          %s212 = scalar_select %p211, %s210, 7
          %s213 = smul.addr %s212, 8
          %s214 = scalar_lea.vmem %s2, %s213
        $region44: #{quantizer_forward.3} parent=39 // pred_fallthru
          _
      $region40: #{quantizer_forward.3} parent=5 // pred_fallthru
        _
    $region6: #{quantizer_forward.3} parent=1 // loop_footer
      %s13 = sadd.s32 1, %s9
    $region7: #{quantizer_forward.3} parent=1 // loop_footer_branch
      %8 = sbr.rel target = $region3
    $region8: #{quantizer_forward.3} parent=1 // loop_exit
      _
    %215 = vsyncpa [#allocation3], 1
    %s216 = scalar_lea.sflag [#allocation3], 1
    %217 = vsyncpa %s216, 1

// kernel: quantizer_forward.2
$region0: #{quantizer_forward.2}
  #allocation0 [shape = 'u32[]', space=smem, size = 0x4, offset = 0x4, fixed_abs, tag = 'smem constant byte address 0x4 - core index']
  #allocation1 [shape = 'u32[144,128]{1,0:T(1,128)}', space=vmem, size = 0x12000, scoped, tag = 'internal scratch']
  %s0 = inlined_call_operand.vmem [shape: f32[64,128], index: 0, kind: input, shape index: {}]
  %s1 = inlined_call_operand.vmem [shape: f32[2,17,8,128], index: 1, kind: output, shape index: {}]
  %s2 = sld [smem:[#allocation0]]
  $region41: #{quantizer_forward.2} parent=0
    _
  %s4 = ssub.s32 1, %s2
  %s5 = scalar_select 0, %s4, %s2
  loop: start=0, step=1, limit=4
  $region2: #{quantizer_forward.2} parent=0 // loop_pre_header
    _
  $region3: #{quantizer_forward.2} parent=0 // loop_header
    %s7 = sphi 0, %s11
    %p8 = scmp.ge.s32.totalorder %s7, 4
    %s14 = sphi 0, %s26
    %s15 = sphi 0, %s22
    %s16 = sphi 0, %s14
    %s17 = sphi 0, %s15
    %s18 = sphi 0, %s16
    %s19 = sphi 0, %s17
    %s31 = sphi 0, %s33
    %s34 = sphi 0, %s31
    %s35 = sphi 0, %s34
    %s51 = sphi 0, %s35
    %s57 = sphi 0, %s59
    %s60 = sphi 0, %s57
    %s61 = sphi 0, %s60
    %s77 = sphi 0, %s61
  $region4: #{quantizer_forward.2} parent=0 // loop_header_branch
    %10 = sbr.rel (%p8) target = $region8
  $region5: #{quantizer_forward.2} parent=0 // loop_body
    %s12 = ssub.s32 %s7, 1
    %s13 = ssub.s32 %s7, 2
    %s20 = sadd.s32 1, %s15
    %p21 = scmp.ge.s32.totalorder %s20, 1
    %s22 = scalar_select %p21, 0, %s20
    %s23 = sadd.s32 1, %s14
    %s24 = scalar_select %p21, %s23, %s14
    %p25 = scmp.ge.s32.totalorder %s24, 2
    %s26 = scalar_select %p25, 0, %s24
    %s27 = sadd.s32 %s14, %s15
    %s28 = sadd.s32 %s26, %s22
    %s29 = ssub.s32 %s27, %s28
    %p30 = scmp.eq.s32.totalorder %s29, 0
    %s32 = sadd.s32 %s31, 1
    %s33 = scalar_select %p30, %s31, %s32
    %p36 = pneg %p30
    %p37 = scmp.eq.s32.totalorder %s7, 1
    %p38 = por %p36, %p37
    %p39 = scmp.ne.s32.totalorder %s31, %s34
    %p40 = scmp.eq.s32.totalorder %s7, 0
    %p41 = por %p39, %p40
    %p42 = scmp.ne.s32.totalorder %s31, %s34
    %p43 = scmp.eq.s32.totalorder %s12, 1
    %p44 = por %p42, %p43
    %p45 = scmp.ne.s32.totalorder %s34, %s35
    %p46 = scmp.eq.s32.totalorder %s12, 0
    %p47 = por %p45, %p46
    %p48 = scmp.ne.s32.totalorder %s34, %s35
    %p49 = scmp.eq.s32.totalorder %s13, 1
    %p50 = por %p48, %p49
    %p52 = scmp.ne.s32.totalorder %s35, %s51
    %p53 = scmp.eq.s32.totalorder %s13, 0
    %p54 = por %p52, %p53
    %s55 = ssub.s32 %s14, %s26
    %p56 = scmp.eq.s32.totalorder %s55, 0
    %s58 = sadd.s32 %s57, 1
    %s59 = scalar_select %p56, %s57, %s58
    %p62 = pneg %p56
    %p63 = scmp.eq.s32.totalorder %s7, 1
    %p64 = por %p62, %p63
    %p65 = scmp.ne.s32.totalorder %s57, %s60
    %p66 = scmp.eq.s32.totalorder %s7, 0
    %p67 = por %p65, %p66
    %p68 = scmp.ne.s32.totalorder %s57, %s60
    %p69 = scmp.eq.s32.totalorder %s12, 1
    %p70 = por %p68, %p69
    %p71 = scmp.ne.s32.totalorder %s60, %s61
    %p72 = scmp.eq.s32.totalorder %s12, 0
    %p73 = por %p71, %p72
    %p74 = scmp.ne.s32.totalorder %s60, %s61
    %p75 = scmp.eq.s32.totalorder %s13, 1
    %p76 = por %p74, %p75
    %p78 = scmp.ne.s32.totalorder %s61, %s77
    %p79 = scmp.eq.s32.totalorder %s13, 0
    %p80 = por %p78, %p79
    %p81 = scmp.le.s32.totalorder 1, %s7
    %p82 = scmp.lt.s32.totalorder %s7, 3
    %p83 = pnand %p81, %p82
    %p84 = pneg %p83
    // Predicated region
    $region9: #{quantizer_forward.2} parent=5 // pred_check
      _
    $region10: #{quantizer_forward.2} parent=5 // pred_check_branch
      %86 = sbr.rel (%p83) target = $region12
    $region11: #{quantizer_forward.2} parent=5 // pred_region
      %s87 = ssub.s32 %s7, 1
    $region12: #{quantizer_forward.2} parent=5 // pred_fallthru
      _
    %p88 = scmp.lt.s32.totalorder %s7, 2
    // Predicated region
    $region13: #{quantizer_forward.2} parent=5 // pred_check
      %p89 = pneg %p88
    $region14: #{quantizer_forward.2} parent=5 // pred_check_branch
      %91 = sbr.rel (%p89) target = $region16
    $region15: #{quantizer_forward.2} parent=5 // pred_region
      // Predicated region
      $region17: #{quantizer_forward.2} parent=15 // pred_check
        %p92 = pneg %p41
      $region18: #{quantizer_forward.2} parent=15 // pred_check_branch
        %94 = sbr.rel (%p92) target = $region20
      $region19: #{quantizer_forward.2} parent=15 // pred_region
        %s95 = sadd.s32 %s14, %s15
        %s96 = smul.u32 4, %s95
        %p97 = scmp.lt.s32.totalorder %s96, 7
        %s98 = scalar_select %p97, %s96, 7
        %s99 = smul.addr %s98, 8
        %s100 = scalar_lea.vmem %s0, %s99
        %s101 = sadd.s32 %s14, %s15
        %s102 = smul.u32 4, %s101
      $region20: #{quantizer_forward.2} parent=15 // pred_fallthru
        _
    $region16: #{quantizer_forward.2} parent=5 // pred_fallthru
      _
    %p103 = scmp.le.s32.totalorder 1, %s7
    %p104 = scmp.lt.s32.totalorder %s7, 3
    %p105 = pnand %p103, %p104
    %p106 = pneg %p105
    // Predicated region
    $region21: #{quantizer_forward.2} parent=5 // pred_check
      _
    $region22: #{quantizer_forward.2} parent=5 // pred_check_branch
      %108 = sbr.rel (%p105) target = $region24
    $region23: #{quantizer_forward.2} parent=5 // pred_region
      %s109 = ssub.s32 %s7, 1
      %s110 = sadd.s32 %s16, %s17
      %s111 = smul.u32 4, %s110
      %p112 = scmp.lt.s32.totalorder %s111, 7
      %s113 = scalar_select %p112, %s111, 7
      %s114 = smul.addr %s113, 8
      %s115 = scalar_lea.vmem %s0, %s114
      %p116 = pneg %p47
      %p117 = pneg %p44
      %p118 = pneg %p73
      %p119 = pneg %p70
      %p120 = scmp.lt.s32.totalorder %s16, 1
      %s121 = scalar_select %p120, %s16, 1
      %s122 = smul.addr %s121, 17
      %s123 = smul.addr %s122, 8
      %s124 = scalar_lea.vmem %s1, %s123
      %s125 = sadd.s32 %s16, %s17
      %s126 = smul.u32 4, %s125
      %p127 = scmp.lt.s32.totalorder %s126, 7
      %s128 = scalar_select %p127, %s126, 7
      %s129 = smul.addr %s128, 8
      %s130 = scalar_lea.vmem %s0, %s129
      %s131 = sadd.s32 %s16, %s17
      %s132 = smul.u32 4, %s131
      %p133 = scmp.lt.s32.totalorder %s16, 1
      %s134 = scalar_select %p133, %s16, 1
      %s135 = smul.addr %s134, 17
      %s136 = smul.addr %s135, 8
      %s137 = scalar_lea.vmem %s1, %s136
      %p138 = scmp.eq.s32.totalorder %s17, 0
      // Predicated region
      $region25: #{quantizer_forward.2} parent=23 // pred_check
        %p139 = pneg %p138
      $region26: #{quantizer_forward.2} parent=23 // pred_check_branch
        %141 = sbr.rel (%p139) target = $region28
      $region27: #{quantizer_forward.2} parent=23 // pred_region
        %142 = vst [vmem:[%s137] sm:$0xff] 0.0
        %143 = vst [vmem:[%s137 + $0x8] sm:$0xff] 0.0
        %144 = vst [vmem:[%s137 + $0x10] sm:$0xff] 0.0
        %145 = vst [vmem:[%s137 + $0x18] sm:$0xff] 0.0
        %146 = vst [vmem:[%s137 + $0x20] sm:$0xff] 0.0
        %147 = vst [vmem:[%s137 + $0x28] sm:$0xff] 0.0
        %148 = vst [vmem:[%s137 + $0x30] sm:$0xff] 0.0
        %149 = vst [vmem:[%s137 + $0x38] sm:$0xff] 0.0
        %150 = vst [vmem:[%s137 + $0x40] sm:$0xff] 0.0
        %151 = vst [vmem:[%s137 + $0x48] sm:$0xff] 0.0
        %152 = vst [vmem:[%s137 + $0x50] sm:$0xff] 0.0
        %153 = vst [vmem:[%s137 + $0x58] sm:$0xff] 0.0
        %154 = vst [vmem:[%s137 + $0x60] sm:$0xff] 0.0
        %155 = vst [vmem:[%s137 + $0x68] sm:$0xff] 0.0
        %156 = vst [vmem:[%s137 + $0x70] sm:$0xff] 0.0
        %157 = vst [vmem:[%s137 + $0x78] sm:$0xff] 0.0
        %158 = vst [vmem:[%s137 + $0x80] sm:$0xff] 0.0
      $region28: #{quantizer_forward.2} parent=23 // pred_fallthru
        _
      %v159 = vld [vmem:[%s130] sm:$0xff]
      %v160 = vld [vmem:[%s130 + $0x8] sm:$0xff]
      %v161 = vld [vmem:[%s130 + $0x10] sm:$0xff]
      %v162 = vld [vmem:[%s130 + $0x18] sm:$0xff]
      %s163 = scalar_lea.vmem %s137, 128
      %v164 = vld [vmem:[%s163] sm:$0xff]
      %v165 = vmul.f32 %v159, %v159
      %v166 = vmul.f32 %v160, %v160
      %v167 = vmul.f32 %v161, %v161
      %v168 = vmul.f32 %v162, %v162
      %v169 = vadd.f32 %v165, %v166
      %v170 = vadd.f32 %v169, %v167
      %v171 = vadd.f32 %v170, %v168
      %v172 = vadd.f32 %v164, %v171
      %173 = vst [vmem:[%s163] sm:$0xff] %v172
      %v174 = vmul.f32 %v159, 128.0
      %v175 = vmul.f32 %v160, 128.0
      %v176 = vmul.f32 %v161, 128.0
      %v177 = vmul.f32 %v162, 128.0
      %v178 = vround.ne.pseudo %v174
      %v179 = vround.ne.pseudo %v175
      %v180 = vround.ne.pseudo %v176
      %v181 = vround.ne.pseudo %v177
      %v182 = vmax.f32 %v178, -128.0
      %v183 = vmax.f32 %v179, -128.0
      %v184 = vmax.f32 %v180, -128.0
      %v185 = vmax.f32 %v181, -128.0
      %v186 = vmin.f32 %v182, 127.0
      %v187 = vmin.f32 %v183, 127.0
      %v188 = vmin.f32 %v184, 127.0
      %v189 = vmin.f32 %v185, 127.0
      %v190 = vld [vmem:[%s137] sm:$0xff]
      %v191 = vmul.f32 %v159, %v186
      %v192 = vmul.f32 %v160, %v187
      %v193 = vmul.f32 %v161, %v188
      %v194 = vmul.f32 %v162, %v189
      %v195 = vadd.f32 %v191, %v192
      %v196 = vadd.f32 %v195, %v193
      %v197 = vadd.f32 %v196, %v194
      %v198 = vadd.f32 %v190, %v197
      %199 = vst [vmem:[%s137] sm:$0xff] %v198
      %s200 = scalar_lea.vmem %s137, 8
      %v201 = vld [vmem:[%s200] sm:$0xff]
      %v202 = vmul.f32 %v186, %v186
      %v203 = vmul.f32 %v187, %v187
      %v204 = vmul.f32 %v188, %v188
      %v205 = vmul.f32 %v189, %v189
      %v206 = vadd.f32 %v202, %v203
      %v207 = vadd.f32 %v206, %v204
      %v208 = vadd.f32 %v207, %v205
      %v209 = vadd.f32 %v201, %v208
      %210 = vst [vmem:[%s200] sm:$0xff] %v209
      %v211 = vmul.f32 %v159, 64.0
      %v212 = vmul.f32 %v160, 64.0
      %v213 = vmul.f32 %v161, 64.0
      %v214 = vmul.f32 %v162, 64.0
      %v215 = vround.ne.pseudo %v211
      %v216 = vround.ne.pseudo %v212
      %v217 = vround.ne.pseudo %v213
      %v218 = vround.ne.pseudo %v214
      %v219 = vmax.f32 %v215, -128.0
      %v220 = vmax.f32 %v216, -128.0
      %v221 = vmax.f32 %v217, -128.0
      %v222 = vmax.f32 %v218, -128.0
      %v223 = vmin.f32 %v219, 127.0
      %v224 = vmin.f32 %v220, 127.0
      %v225 = vmin.f32 %v221, 127.0
      %v226 = vmin.f32 %v222, 127.0
      %s227 = scalar_lea.vmem %s137, 16
      %v228 = vld [vmem:[%s227] sm:$0xff]
      %v229 = vmul.f32 %v159, %v223
      %v230 = vmul.f32 %v160, %v224
      %v231 = vmul.f32 %v161, %v225
      %v232 = vmul.f32 %v162, %v226
      %v233 = vadd.f32 %v229, %v230
      %v234 = vadd.f32 %v233, %v231
      %v235 = vadd.f32 %v234, %v232
      %v236 = vadd.f32 %v228, %v235
      %237 = vst [vmem:[%s227] sm:$0xff] %v236
      %s238 = scalar_lea.vmem %s137, 24
      %v239 = vld [vmem:[%s238] sm:$0xff]
      %v240 = vmul.f32 %v223, %v223
      %v241 = vmul.f32 %v224, %v224
      %v242 = vmul.f32 %v225, %v225
      %v243 = vmul.f32 %v226, %v226
      %v244 = vadd.f32 %v240, %v241
      %v245 = vadd.f32 %v244, %v242
      %v246 = vadd.f32 %v245, %v243
      %v247 = vadd.f32 %v239, %v246
      %248 = vst [vmem:[%s238] sm:$0xff] %v247
      %v249 = vmul.f32 %v159, 32.0
      %v250 = vmul.f32 %v160, 32.0
      %v251 = vmul.f32 %v161, 32.0
      %v252 = vmul.f32 %v162, 32.0
      %v253 = vround.ne.pseudo %v249
      %v254 = vround.ne.pseudo %v250
      %v255 = vround.ne.pseudo %v251
      %v256 = vround.ne.pseudo %v252
      %v257 = vmax.f32 %v253, -128.0
      %v258 = vmax.f32 %v254, -128.0
      %v259 = vmax.f32 %v255, -128.0
      %v260 = vmax.f32 %v256, -128.0
      %v261 = vmin.f32 %v257, 127.0
      %v262 = vmin.f32 %v258, 127.0
      %v263 = vmin.f32 %v259, 127.0
      %v264 = vmin.f32 %v260, 127.0
      %s265 = scalar_lea.vmem %s137, 32
      %v266 = vld [vmem:[%s265] sm:$0xff]
      %v267 = vmul.f32 %v159, %v261
      %v268 = vmul.f32 %v160, %v262
      %v269 = vmul.f32 %v161, %v263
      %v270 = vmul.f32 %v162, %v264
      %v271 = vadd.f32 %v267, %v268
      %v272 = vadd.f32 %v271, %v269
      %v273 = vadd.f32 %v272, %v270
      %v274 = vadd.f32 %v266, %v273
      %275 = vst [vmem:[%s265] sm:$0xff] %v274
      %s276 = scalar_lea.vmem %s137, 40
      %v277 = vld [vmem:[%s276] sm:$0xff]
      %v278 = vmul.f32 %v261, %v261
      %v279 = vmul.f32 %v262, %v262
      %v280 = vmul.f32 %v263, %v263
      %v281 = vmul.f32 %v264, %v264
      %v282 = vadd.f32 %v278, %v279
      %v283 = vadd.f32 %v282, %v280
      %v284 = vadd.f32 %v283, %v281
      %v285 = vadd.f32 %v277, %v284
      %286 = vst [vmem:[%s276] sm:$0xff] %v285
      %v287 = vmul.f32 %v159, 16.0
      %v288 = vmul.f32 %v160, 16.0
      %v289 = vmul.f32 %v161, 16.0
      %v290 = vmul.f32 %v162, 16.0
      %v291 = vround.ne.pseudo %v287
      %v292 = vround.ne.pseudo %v288
      %v293 = vround.ne.pseudo %v289
      %v294 = vround.ne.pseudo %v290
      %v295 = vmax.f32 %v291, -128.0
      %v296 = vmax.f32 %v292, -128.0
      %v297 = vmax.f32 %v293, -128.0
      %v298 = vmax.f32 %v294, -128.0
      %v299 = vmin.f32 %v295, 127.0
      %v300 = vmin.f32 %v296, 127.0
      %v301 = vmin.f32 %v297, 127.0
      %v302 = vmin.f32 %v298, 127.0
      %s303 = scalar_lea.vmem %s137, 48
      %v304 = vld [vmem:[%s303] sm:$0xff]
      %v305 = vmul.f32 %v159, %v299
      %v306 = vmul.f32 %v160, %v300
      %v307 = vmul.f32 %v161, %v301
      %v308 = vmul.f32 %v162, %v302
      %v309 = vadd.f32 %v305, %v306
      %v310 = vadd.f32 %v309, %v307
      %v311 = vadd.f32 %v310, %v308
      %v312 = vadd.f32 %v304, %v311
      %313 = vst [vmem:[%s303] sm:$0xff] %v312
      %s314 = scalar_lea.vmem %s137, 56
      %v315 = vld [vmem:[%s314] sm:$0xff]
      %v316 = vmul.f32 %v299, %v299
      %v317 = vmul.f32 %v300, %v300
      %v318 = vmul.f32 %v301, %v301
      %v319 = vmul.f32 %v302, %v302
      %v320 = vadd.f32 %v316, %v317
      %v321 = vadd.f32 %v320, %v318
      %v322 = vadd.f32 %v321, %v319
      %v323 = vadd.f32 %v315, %v322
      %324 = vst [vmem:[%s314] sm:$0xff] %v323
      %v325 = vmul.f32 %v159, 8.0
      %v326 = vmul.f32 %v160, 8.0
      %v327 = vmul.f32 %v161, 8.0
      %v328 = vmul.f32 %v162, 8.0
      %v329 = vround.ne.pseudo %v325
      %v330 = vround.ne.pseudo %v326
      %v331 = vround.ne.pseudo %v327
      %v332 = vround.ne.pseudo %v328
      %v333 = vmax.f32 %v329, -128.0
      %v334 = vmax.f32 %v330, -128.0
      %v335 = vmax.f32 %v331, -128.0
      %v336 = vmax.f32 %v332, -128.0
      %v337 = vmin.f32 %v333, 127.0
      %v338 = vmin.f32 %v334, 127.0
      %v339 = vmin.f32 %v335, 127.0
      %v340 = vmin.f32 %v336, 127.0
      %s341 = scalar_lea.vmem %s137, 64
      %v342 = vld [vmem:[%s341] sm:$0xff]
      %v343 = vmul.f32 %v159, %v337
      %v344 = vmul.f32 %v160, %v338
      %v345 = vmul.f32 %v161, %v339
      %v346 = vmul.f32 %v162, %v340
      %v347 = vadd.f32 %v343, %v344
      %v348 = vadd.f32 %v347, %v345
      %v349 = vadd.f32 %v348, %v346
      %v350 = vadd.f32 %v342, %v349
      %351 = vst [vmem:[%s341] sm:$0xff] %v350
      %s352 = scalar_lea.vmem %s137, 72
      %v353 = vld [vmem:[%s352] sm:$0xff]
      %v354 = vmul.f32 %v337, %v337
      %v355 = vmul.f32 %v338, %v338
      %v356 = vmul.f32 %v339, %v339
      %v357 = vmul.f32 %v340, %v340
      %v358 = vadd.f32 %v354, %v355
      %v359 = vadd.f32 %v358, %v356
      %v360 = vadd.f32 %v359, %v357
      %v361 = vadd.f32 %v353, %v360
      %362 = vst [vmem:[%s352] sm:$0xff] %v361
      %v363 = vmul.f32 %v159, 4.0
      %v364 = vmul.f32 %v160, 4.0
      %v365 = vmul.f32 %v161, 4.0
      %v366 = vmul.f32 %v162, 4.0
      %v367 = vround.ne.pseudo %v363
      %v368 = vround.ne.pseudo %v364
      %v369 = vround.ne.pseudo %v365
      %v370 = vround.ne.pseudo %v366
      %v371 = vmax.f32 %v367, -128.0
      %v372 = vmax.f32 %v368, -128.0
      %v373 = vmax.f32 %v369, -128.0
      %v374 = vmax.f32 %v370, -128.0
      %v375 = vmin.f32 %v371, 127.0
      %v376 = vmin.f32 %v372, 127.0
      %v377 = vmin.f32 %v373, 127.0
      %v378 = vmin.f32 %v374, 127.0
      %s379 = scalar_lea.vmem %s137, 80
      %v380 = vld [vmem:[%s379] sm:$0xff]
      %v381 = vmul.f32 %v159, %v375
      %v382 = vmul.f32 %v160, %v376
      %v383 = vmul.f32 %v161, %v377
      %v384 = vmul.f32 %v162, %v378
      %v385 = vadd.f32 %v381, %v382
      %v386 = vadd.f32 %v385, %v383
      %v387 = vadd.f32 %v386, %v384
      %v388 = vadd.f32 %v380, %v387
      %389 = vst [vmem:[%s379] sm:$0xff] %v388
      %s390 = scalar_lea.vmem %s137, 88
      %v391 = vld [vmem:[%s390] sm:$0xff]
      %v392 = vmul.f32 %v375, %v375
      %v393 = vmul.f32 %v376, %v376
      %v394 = vmul.f32 %v377, %v377
      %v395 = vmul.f32 %v378, %v378
      %v396 = vadd.f32 %v392, %v393
      %v397 = vadd.f32 %v396, %v394
      %v398 = vadd.f32 %v397, %v395
      %v399 = vadd.f32 %v391, %v398
      %400 = vst [vmem:[%s390] sm:$0xff] %v399
      %v401 = vmul.f32 %v159, 2.0
      %v402 = vmul.f32 %v160, 2.0
      %v403 = vmul.f32 %v161, 2.0
      %v404 = vmul.f32 %v162, 2.0
      %v405 = vround.ne.pseudo %v401
      %v406 = vround.ne.pseudo %v402
      %v407 = vround.ne.pseudo %v403
      %v408 = vround.ne.pseudo %v404
      %v409 = vmax.f32 %v405, -128.0
      %v410 = vmax.f32 %v406, -128.0
      %v411 = vmax.f32 %v407, -128.0
      %v412 = vmax.f32 %v408, -128.0
      %v413 = vmin.f32 %v409, 127.0
      %v414 = vmin.f32 %v410, 127.0
      %v415 = vmin.f32 %v411, 127.0
      %v416 = vmin.f32 %v412, 127.0
      %s417 = scalar_lea.vmem %s137, 96
      %v418 = vld [vmem:[%s417] sm:$0xff]
      %v419 = vmul.f32 %v159, %v413
      %v420 = vmul.f32 %v160, %v414
      %v421 = vmul.f32 %v161, %v415
      %v422 = vmul.f32 %v162, %v416
      %v423 = vadd.f32 %v419, %v420
      %v424 = vadd.f32 %v423, %v421
      %v425 = vadd.f32 %v424, %v422
      %v426 = vadd.f32 %v418, %v425
      %427 = vst [vmem:[%s417] sm:$0xff] %v426
      %s428 = scalar_lea.vmem %s137, 104
      %v429 = vld [vmem:[%s428] sm:$0xff]
      %v430 = vmul.f32 %v413, %v413
      %v431 = vmul.f32 %v414, %v414
      %v432 = vmul.f32 %v415, %v415
      %v433 = vmul.f32 %v416, %v416
      %v434 = vadd.f32 %v430, %v431
      %v435 = vadd.f32 %v434, %v432
      %v436 = vadd.f32 %v435, %v433
      %v437 = vadd.f32 %v429, %v436
      %438 = vst [vmem:[%s428] sm:$0xff] %v437
      %v439 = vround.ne.pseudo %v159
      %v440 = vround.ne.pseudo %v160
      %v441 = vround.ne.pseudo %v161
      %v442 = vround.ne.pseudo %v162
      %v443 = vmax.f32 %v439, -128.0
      %v444 = vmax.f32 %v440, -128.0
      %v445 = vmax.f32 %v441, -128.0
      %v446 = vmax.f32 %v442, -128.0
      %v447 = vmin.f32 %v443, 127.0
      %v448 = vmin.f32 %v444, 127.0
      %v449 = vmin.f32 %v445, 127.0
      %v450 = vmin.f32 %v446, 127.0
      %s451 = scalar_lea.vmem %s137, 112
      %v452 = vld [vmem:[%s451] sm:$0xff]
      %v453 = vmul.f32 %v159, %v447
      %v454 = vmul.f32 %v160, %v448
      %v455 = vmul.f32 %v161, %v449
      %v456 = vmul.f32 %v162, %v450
      %v457 = vadd.f32 %v453, %v454
      %v458 = vadd.f32 %v457, %v455
      %v459 = vadd.f32 %v458, %v456
      %v460 = vadd.f32 %v452, %v459
      %461 = vst [vmem:[%s451] sm:$0xff] %v460
      %s462 = scalar_lea.vmem %s137, 120
      %v463 = vld [vmem:[%s462] sm:$0xff]
      %v464 = vmul.f32 %v447, %v447
      %v465 = vmul.f32 %v448, %v448
      %v466 = vmul.f32 %v449, %v449
      %v467 = vmul.f32 %v450, %v450
      %v468 = vadd.f32 %v464, %v465
      %v469 = vadd.f32 %v468, %v466
      %v470 = vadd.f32 %v469, %v467
      %v471 = vadd.f32 %v463, %v470
      %472 = vst [vmem:[%s462] sm:$0xff] %v471
      %p473 = scmp.lt.s32.totalorder %s16, 1
      %s474 = scalar_select %p473, %s16, 1
      %s475 = smul.addr %s474, 17
      %s476 = smul.addr %s475, 8
      %s477 = scalar_lea.vmem %s1, %s476
      // Predicated region
      $region29: #{quantizer_forward.2} parent=23 // pred_check
        %p478 = pneg %p70
      $region30: #{quantizer_forward.2} parent=23 // pred_check_branch
        %480 = sbr.rel (%p478) target = $region32
      $region31: #{quantizer_forward.2} parent=23 // pred_region
        _
      $region32: #{quantizer_forward.2} parent=23 // pred_fallthru
        _
    $region24: #{quantizer_forward.2} parent=5 // pred_fallthru
      _
    %p481 = scmp.le.s32.totalorder 2, %s7
    // Predicated region
    $region33: #{quantizer_forward.2} parent=5 // pred_check
      %p482 = pneg %p481
    $region34: #{quantizer_forward.2} parent=5 // pred_check_branch
      %484 = sbr.rel (%p482) target = $region36
    $region35: #{quantizer_forward.2} parent=5 // pred_region
      %s485 = ssub.s32 %s7, 2
      // Predicated region
      $region37: #{quantizer_forward.2} parent=35 // pred_check
        %p486 = pneg %p76
      $region38: #{quantizer_forward.2} parent=35 // pred_check_branch
        %488 = sbr.rel (%p486) target = $region40
      $region39: #{quantizer_forward.2} parent=35 // pred_region
        %p489 = scmp.lt.s32.totalorder %s18, 1
        %s490 = scalar_select %p489, %s18, 1
        %s491 = smul.addr %s490, 17
        %s492 = smul.addr %s491, 8
        %s493 = scalar_lea.vmem %s1, %s492
      $region40: #{quantizer_forward.2} parent=35 // pred_fallthru
        _
    $region36: #{quantizer_forward.2} parent=5 // pred_fallthru
      _
  $region6: #{quantizer_forward.2} parent=0 // loop_footer
    %s11 = sadd.s32 1, %s7
  $region7: #{quantizer_forward.2} parent=0 // loop_footer_branch
    %6 = sbr.rel target = $region3
  $region8: #{quantizer_forward.2} parent=0 // loop_exit
    _

</llo_original>
